<compile_context>
chip_gen: v5e
topology: v5e:2x2
jax: 0.10.0
libtpu: 0.0.40
codegen_flags: <defaults>
</compile_context>

<pallas_src>
import jax
import jax.numpy as jnp
from jax import lax
from jax.experimental import pallas as pl
from jax.experimental.pallas import tpu as pltpu

LANES = 128


def _round_up(x, m):
    return (x + m - 1) // m * m


# ----------------------------- Pallas kernels ------------------------------ #
def conv_bn_relu_kernel(p_ref, w_ref, b_ref, o_ref):
    """(TM, K) bf16 x (K, Cp) bf16 on the MXU, folded-BN bias + ReLU in f32."""
    acc = jnp.dot(p_ref[...], w_ref[...], preferred_element_type=jnp.float32)
    o_ref[...] = jnp.maximum(acc + b_ref[...], 0.0).astype(o_ref.dtype)


def maxpool3x3s2_kernel(y_ref, o_ref):
    """3x3 / stride-2 / pad-1 max-pool of a post-ReLU feature map.

    y_ref: (1, Hp, 2, Wp, 2*Cp) -- conv output with the row parity exposed on
           axis 2 and the column parity folded into the channel axis (both are
           free reshapes in HBM).
    o_ref: (1, Hp, Wp, Cp)
    Post-ReLU values are >= 0, so zero-fill at the borders is equivalent to
    -inf padding.  The 9 taps reduce to unrolled VPU maxima plus two in-VMEM
    shifts -- no HBM window expansion, no XLU axis-reduce.
    """
    cp = o_ref.shape[-1]
    y = y_ref[0]                                   # (Hp, 2, Wp, 2*Cp)
    even_r = y[:, 0]                               # rows 2*ph
    odd_r = y[:, 1]                                # rows 2*ph + 1
    # rows 2*ph - 1 == odd rows shifted by one along ph (zero-fill at ph == 0)
    prev_odd_r = jnp.concatenate([jnp.zeros_like(odd_r[:1]), odd_r[:-1]], axis=0)
    rowmax = jnp.maximum(jnp.maximum(even_r, odd_r), prev_odd_r)   # (Hp, Wp, 2*Cp)

    even_c = rowmax[:, :, :cp]                     # cols 2*pw
    odd_c = rowmax[:, :, cp:]                      # cols 2*pw + 1
    # cols 2*pw - 1 == odd cols shifted by one along pw (zero-fill at pw == 0)
    prev_odd_c = jnp.concatenate(
        [jnp.zeros_like(odd_c[:, :1]), odd_c[:, :-1]], axis=1)
    o_ref[0] = jnp.maximum(jnp.maximum(even_c, odd_c), prev_odd_c)


# --------------------------------- Wrapper ---------------------------------- #
def feature_extractor_forward(x_nchw, w_oihw, bn_gamma, bn_beta, bn_mean, bn_var,
                              eps=1e-5, tm=512):
    N, C, H, W = x_nchw.shape
    OC = w_oihw.shape[0]
    Cp = _round_up(OC, LANES)                      # lane-dense output channels

    # ---- conv1: 7x7 / stride 2 / pad 3 as a tiled im2col matmul ----
    Ho = (H + 2 * 3 - 7) // 2 + 1
    Wo = (W + 2 * 3 - 7) // 2 + 1
    K = 7 * 7 * C
    M = N * Ho * Wo

    # bf16 MXU inputs (accumulate + epilogue in f32 inside the kernel)
    x = jnp.transpose(x_nchw, (0, 2, 3, 1)).astype(jnp.bfloat16)          # NHWC
    xp = jnp.pad(x, ((0, 0), (3, 3), (3, 3), (0, 0)))
    # im2col via 49 strided slices (no gather); feature order = (kh, kw, c)
    cols = []
    for i in range(7):
        for j in range(7):
            cols.append(lax.slice(
                xp, (0, i, j, 0),
                (N, i + 2 * (Ho - 1) + 1, j + 2 * (Wo - 1) + 1, C),
                (1, 2, 2, 1)))
    patches = jnp.concatenate(cols, axis=-1).reshape(M, K)

    tm = min(tm, _round_up(M, 8))
    m_pad = _round_up(M, tm)
    if m_pad != M:
        patches = jnp.pad(patches, ((0, m_pad - M), (0, 0)))

    # fold eval-mode BN scale into the weights; keep only bias + ReLU in-kernel
    scale = bn_gamma / jnp.sqrt(bn_var + eps)                              # (OC,)
    bias = bn_beta - bn_mean * scale                                       # (OC,)
    w_mat = jnp.transpose(w_oihw, (2, 3, 1, 0)).reshape(K, OC)             # (kh,kw,c) rows
    w_mat = jnp.pad((w_mat * scale[None, :]).astype(jnp.bfloat16),
                    ((0, 0), (0, Cp - OC)))
    bias_p = jnp.pad(bias, (0, Cp - OC)).reshape(1, Cp).astype(jnp.float32)

    conv_out = pl.pallas_call(
        conv_bn_relu_kernel,
        out_shape=jax.ShapeDtypeStruct((m_pad, Cp), jnp.float32),
        grid=(m_pad // tm,),
        in_specs=[
            pl.BlockSpec((tm, K), lambda i: (i, 0)),      # patches tile (streamed)
            pl.BlockSpec((K, Cp), lambda i: (0, 0)),      # folded weights (pinned)
            pl.BlockSpec((1, Cp), lambda i: (0, 0)),      # folded BN bias (pinned)
        ],
        out_specs=pl.BlockSpec((tm, Cp), lambda i: (i, 0)),
        compiler_params=pltpu.CompilerParams(
            dimension_semantics=("parallel",),
            vmem_limit_bytes=32 * 1024 * 1024),
    )(patches, w_mat, bias_p)

    # ---- maxpool: 3x3 / stride 2 / pad 1 ----
    y = conv_out[:M].reshape(N, Ho, Wo, Cp)
    # pad to even spatial dims (zero padding is safe post-ReLU); no-op for the
    # standard ResNet stem shapes
    if Ho % 2:
        y = jnp.pad(y, ((0, 0), (0, 1), (0, 0), (0, 0)))
    if Wo % 2:
        y = jnp.pad(y, ((0, 0), (0, 0), (0, 1), (0, 0)))
    hp, wp = y.shape[1] // 2, y.shape[2] // 2
    # free reshapes: expose row parity, fold column parity into channels
    y = y.reshape(N, hp, 2, wp, 2 * Cp)

    pooled = pl.pallas_call(
        maxpool3x3s2_kernel,
        out_shape=jax.ShapeDtypeStruct((N, hp, wp, Cp), jnp.float32),
        grid=(N,),
        in_specs=[pl.BlockSpec((1, hp, 2, wp, 2 * Cp),
                               lambda n: (n, 0, 0, 0, 0))],
        out_specs=pl.BlockSpec((1, hp, wp, Cp), lambda n: (n, 0, 0, 0)),
        compiler_params=pltpu.CompilerParams(
            dimension_semantics=("parallel",),
            vmem_limit_bytes=32 * 1024 * 1024),
    )(y)

    # drop channel padding, return NCHW
    return jnp.transpose(pooled[..., :OC], (0, 3, 1, 2))


# --------------------------------- Main ------------------------------------ #
if __name__ == "__main__":
    key = jax.random.PRNGKey(0)
    k1, k2, k3, k4, k5, k6 = jax.random.split(key, 6)

    N, C, H, W = 2, 3, 16, 16        # resnet conv1 expects 3 input channels
    OC = 64
    x = jax.random.normal(k1, (N, C, H, W), jnp.float32)
    w = jax.random.normal(k2, (OC, C, 7, 7), jnp.float32) * 0.05
    gamma = 1.0 + 0.1 * jax.random.normal(k3, (OC,), jnp.float32)
    beta = 0.1 * jax.random.normal(k4, (OC,), jnp.float32)
    mean = 0.1 * jax.random.normal(k5, (OC,), jnp.float32)
    var = jnp.abs(jax.random.normal(k6, (OC,), jnp.float32)) + 0.5

    fwd = jax.jit(feature_extractor_forward)
    out = jax.block_until_ready(fwd(x, w, gamma, beta, mean, var))
    assert out.shape == (N, OC, 4, 4), out.shape

    eps = 1e-5
    scale = gamma / jnp.sqrt(var + eps)
    bias = beta - mean * scale

    def _pool(z):
        return lax.reduce_window(
            z, -jnp.inf, lax.max,
            window_dimensions=(1, 1, 3, 3), window_strides=(1, 1, 2, 2),
            padding=((0, 0), (0, 0), (1, 1), (1, 1)))

    # (a) strict reference: same bf16-quantized operands, f32 accumulation
    #     (only reduction-order differences vs. the MXU path)
    xq = x.astype(jnp.bfloat16).astype(jnp.float32)
    wq = (w * scale[:, None, None, None]).astype(jnp.bfloat16).astype(jnp.float32)
    ref = lax.conv_general_dilated(
        xq, wq, (2, 2), ((3, 3), (3, 3)),
        dimension_numbers=("NCHW", "OIHW", "NCHW"))
    ref = _pool(jnp.maximum(ref + bias[None, :, None, None], 0.0))
    assert jnp.allclose(out, ref, atol=1e-3, rtol=1e-3), \
        float(jnp.max(jnp.abs(out - ref)))

    # (b) loose reference: original f32 module semantics (bf16 MXU inputs ->
    #     loosened tolerance)
    ref32 = lax.conv_general_dilated(
        x, w, (2, 2), ((3, 3), (3, 3)),
        dimension_numbers=("NCHW", "OIHW", "NCHW"))
    ref32 = _pool(jnp.maximum(
        ref32 * scale[None, :, None, None] + bias[None, :, None, None], 0.0))
    assert jnp.allclose(out, ref32, atol=5e-2, rtol=5e-2)

    print("KERNEL_OK")
</pallas_src>

<mosaic_0001>
module attributes {stable_mosaic.version = 11 : i64} {
  func.func @conv_bn_relu_kernel(%arg0: i32, %arg1: memref<128x147xbf16, #tpu.memory_space<vmem>>, %arg2: memref<147x128xbf16, #tpu.memory_space<vmem>>, %arg3: memref<1x128xf32, #tpu.memory_space<vmem>>, %arg4: memref<128x128xf32, #tpu.memory_space<vmem>>) attributes {dimension_semantics = [#tpu.dimension_semantics<parallel>], iteration_bounds = array<i64: 1>, scalar_prefetch = 0 : i64, scratch_operands = 0 : i64, tpu.core_type = #tpu.core_type<tc>, window_params = [{transform_indices = @transform_0, window_bounds = array<i64: 128, 147>}, {pipeline_mode = #tpu.pipeline_mode<synchronous>, transform_indices = @transform_1, window_bounds = array<i64: 147, 128>}, {pipeline_mode = #tpu.pipeline_mode<synchronous>, transform_indices = @transform_2, window_bounds = array<i64: 1, 128>}, {transform_indices = @transform_3, window_bounds = array<i64: 128, 128>}]} {
    %c0 = arith.constant 0 : index
    %c0_0 = arith.constant 0 : index
    %0 = vector.load %arg1[%c0, %c0_0] : memref<128x147xbf16, #tpu.memory_space<vmem>>, vector<128x147xbf16>
    %c0_1 = arith.constant 0 : index
    %c0_2 = arith.constant 0 : index
    %1 = vector.load %arg2[%c0_1, %c0_2] : memref<147x128xbf16, #tpu.memory_space<vmem>>, vector<147x128xbf16>
    %cst = arith.constant dense<0.000000e+00> : vector<128x128xf32>
    %2 = tpu.matmul %0, %1, %cst {dimension_numbers = #tpu.dot_dimension_numbers<[1], [0], [0], [1], [0, 0, 1, 1], [], []>} : vector<128x147xbf16>, vector<147x128xbf16>, vector<128x128xf32> -> vector<128x128xf32>
    %c0_3 = arith.constant 0 : index
    %c0_4 = arith.constant 0 : index
    %3 = vector.load %arg3[%c0_3, %c0_4] : memref<1x128xf32, #tpu.memory_space<vmem>>, vector<1x128xf32>
    %4 = vector.broadcast %3 : vector<1x128xf32> to vector<128x128xf32>
    %5 = arith.addf %2, %4 : vector<128x128xf32>
    %cst_5 = arith.constant 0.000000e+00 : f32
    %6 = vector.broadcast %cst_5 : f32 to vector<128x128xf32>
    %7 = arith.maximumf %5, %6 : vector<128x128xf32>
    %c0_6 = arith.constant 0 : index
    %c0_7 = arith.constant 0 : index
    %8 = vector.load %arg4[%c0_6, %c0_7] : memref<128x128xf32, #tpu.memory_space<vmem>>, vector<128x128xf32>
    tpu.vector_store %arg4[%c0_6, %c0_7], %7 {strides = array<i32>} : memref<128x128xf32, #tpu.memory_space<vmem>>, vector<128x128xf32>,
    return
  }
  func.func @transform_0(%arg0: i32) -> (i32, i32) {
    %c0_i32 = arith.constant 0 : i32
    %c0_i32_0 = arith.constant 0 : i32
    return %arg0, %c0_i32 : i32, i32
  }
  func.func @transform_1(%arg0: i32) -> (i32, i32) {
    %c0_i32 = arith.constant 0 : i32
    %c0_i32_0 = arith.constant 0 : i32
    %c0_i32_1 = arith.constant 0 : i32
    return %c0_i32, %c0_i32_0 : i32, i32
  }
  func.func @transform_2(%arg0: i32) -> (i32, i32) {
    %c0_i32 = arith.constant 0 : i32
    %c0_i32_0 = arith.constant 0 : i32
    %c0_i32_1 = arith.constant 0 : i32
    return %c0_i32, %c0_i32_0 : i32, i32
  }
  func.func @transform_3(%arg0: i32) -> (i32, i32) {
    %c0_i32 = arith.constant 0 : i32
    %c0_i32_0 = arith.constant 0 : i32
    return %arg0, %c0_i32 : i32, i32
  }
}

module attributes {stable_mosaic.version = 11 : i64} {
  func.func @maxpool3x3s2_kernel(%arg0: i32, %arg1: memref<1x4x2x4x256xf32, #tpu.memory_space<vmem>>, %arg2: memref<1x4x4x128xf32, #tpu.memory_space<vmem>>) attributes {dimension_semantics = [#tpu.dimension_semantics<parallel>], iteration_bounds = array<i64: 2>, scalar_prefetch = 0 : i64, scratch_operands = 0 : i64, tpu.core_type = #tpu.core_type<tc>, window_params = [{transform_indices = @transform_0, window_bounds = array<i64: 1, 4, 2, 4, 256>}, {transform_indices = @transform_1, window_bounds = array<i64: 1, 4, 4, 128>}]} {
    %c0 = arith.constant 0 : index
    %c0_0 = arith.constant 0 : index
    %c0_1 = arith.constant 0 : index
    %c0_2 = arith.constant 0 : index
    %c0_3 = arith.constant 0 : index
    %0 = vector.load %arg1[%c0, %c0_0, %c0_1, %c0_2, %c0_3] : memref<1x4x2x4x256xf32, #tpu.memory_space<vmem>>, vector<1x4x2x4x256xf32>
    %1 = vector.shape_cast %0 : vector<1x4x2x4x256xf32> to vector<4x2x4x256xf32>
    %2 = vector.extract_strided_slice %1 {offsets = [0, 0, 0, 0], sizes = [4, 1, 4, 256], strides = [1, 1, 1, 1]} : vector<4x2x4x256xf32> to vector<4x1x4x256xf32>
    %3 = vector.shape_cast %2 : vector<4x1x4x256xf32> to vector<4x4x256xf32>
    %4 = vector.extract_strided_slice %1 {offsets = [0, 1, 0, 0], sizes = [4, 1, 4, 256], strides = [1, 1, 1, 1]} : vector<4x2x4x256xf32> to vector<4x1x4x256xf32>
    %5 = vector.shape_cast %4 : vector<4x1x4x256xf32> to vector<4x4x256xf32>
    %cst = arith.constant 0.000000e+00 : f32
    %6 = vector.broadcast %cst : f32 to vector<1x4x256xf32>
    %7 = vector.extract_strided_slice %5 {offsets = [0, 0, 0], sizes = [3, 4, 256], strides = [1, 1, 1]} : vector<4x4x256xf32> to vector<3x4x256xf32>
    %8 = tpu.concatenate %6, %7 in 0 : vector<1x4x256xf32>, vector<3x4x256xf32> -> vector<4x4x256xf32>
    %9 = arith.maximumf %3, %5 : vector<4x4x256xf32>
    %10 = arith.maximumf %9, %8 : vector<4x4x256xf32>
    %11 = vector.extract_strided_slice %10 {offsets = [0, 0, 0], sizes = [4, 4, 128], strides = [1, 1, 1]} : vector<4x4x256xf32> to vector<4x4x128xf32>
    %12 = vector.extract_strided_slice %10 {offsets = [0, 0, 128], sizes = [4, 4, 128], strides = [1, 1, 1]} : vector<4x4x256xf32> to vector<4x4x128xf32>
    %cst_4 = arith.constant 0.000000e+00 : f32
    %13 = vector.broadcast %cst_4 : f32 to vector<4x1x128xf32>
    %14 = vector.extract_strided_slice %12 {offsets = [0, 0, 0], sizes = [4, 3, 128], strides = [1, 1, 1]} : vector<4x4x128xf32> to vector<4x3x128xf32>
    %15 = tpu.concatenate %13, %14 in 1 : vector<4x1x128xf32>, vector<4x3x128xf32> -> vector<4x4x128xf32>
    %16 = arith.maximumf %11, %12 : vector<4x4x128xf32>
    %17 = arith.maximumf %16, %15 : vector<4x4x128xf32>
    %c0_5 = arith.constant 0 : index
    %c0_6 = arith.constant 0 : index
    %c0_7 = arith.constant 0 : index
    %c0_8 = arith.constant 0 : index
    %18 = vector.load %arg2[%c0_5, %c0_6, %c0_7, %c0_8] : memref<1x4x4x128xf32, #tpu.memory_space<vmem>>, vector<1x4x4x128xf32>
    %19 = vector.shape_cast %18 : vector<1x4x4x128xf32> to vector<4x4x128xf32>
    %20 = vector.shape_cast %17 : vector<4x4x128xf32> to vector<1x4x4x128xf32>
    tpu.vector_store %arg2[%c0_5, %c0_6, %c0_7, %c0_8], %20 {strides = array<i32>} : memref<1x4x4x128xf32, #tpu.memory_space<vmem>>, vector<1x4x4x128xf32>,
    return
  }
  func.func @transform_0(%arg0: i32) -> (i32, i32, i32, i32, i32) {
    %c0_i32 = arith.constant 0 : i32
    %c0_i32_0 = arith.constant 0 : i32
    %c0_i32_1 = arith.constant 0 : i32
    %c0_i32_2 = arith.constant 0 : i32
    %c0_i32_3 = arith.constant 0 : i32
    return %arg0, %c0_i32, %c0_i32_0, %c0_i32_1, %c0_i32_2 : i32, i32, i32, i32, i32
  }
  func.func @transform_1(%arg0: i32) -> (i32, i32, i32, i32) {
    %c0_i32 = arith.constant 0 : i32
    %c0_i32_0 = arith.constant 0 : i32
    %c0_i32_1 = arith.constant 0 : i32
    %c0_i32_2 = arith.constant 0 : i32
    return %arg0, %c0_i32, %c0_i32_0, %c0_i32_1 : i32, i32, i32, i32
  }
}

</mosaic_0001>

<llo_original>
// kernel: feature_extractor_forward.3
$region0: #{feature_extractor_forward.3}
  #allocation0 [shape = 'u32[]', space=smem, size = 0x4, offset = 0x4, fixed_abs, tag = 'smem constant byte address 0x4 - core index']
  #allocation1 [shape = 'u32[72,128]{1,0:T(1,128)}', space=vmem, size = 0x9000, scoped, tag = 'internal scratch']
  %s0 = inlined_call_operand.vmem [shape: f32[2,4,2,4,256], index: 0, kind: input, shape index: {}]
  %s1 = inlined_call_operand.vmem [shape: f32[2,4,4,128], index: 1, kind: output, shape index: {}]
  %s2 = sld [smem:[#allocation0]]
  $region37: #{feature_extractor_forward.3} parent=0
    _
  %s4 = ssub.s32 1, %s2
  %s5 = scalar_select 0, %s4, %s2
  loop: start=0, step=1, limit=4
  $region2: #{feature_extractor_forward.3} parent=0 // loop_pre_header
    _
  $region3: #{feature_extractor_forward.3} parent=0 // loop_header
    %s7 = sphi 0, %s11
    %p8 = scmp.ge.s32.totalorder %s7, 4
    %s17 = sphi 0, %s19
    %s20 = sphi 0, %s17
    %s21 = sphi 0, %s20
    %s37 = sphi 0, %s21
    %s43 = sphi 0, %s45
    %s46 = sphi 0, %s43
    %s47 = sphi 0, %s46
    %s63 = sphi 0, %s47
  $region4: #{feature_extractor_forward.3} parent=0 // loop_header_branch
    %10 = sbr.rel (%p8) target = $region8
  $region5: #{feature_extractor_forward.3} parent=0 // loop_body
    %s12 = ssub.s32 %s7, 1
    %s13 = ssub.s32 %s7, 2
    %s14 = sadd.s32 %s7, 1
    %s15 = ssub.s32 %s7, %s14
    %p16 = scmp.eq.s32.totalorder %s15, 0
    %s18 = sadd.s32 %s17, 1
    %s19 = scalar_select %p16, %s17, %s18
    %p22 = pneg %p16
    %p23 = scmp.eq.s32.totalorder %s7, 1
    %p24 = por %p22, %p23
    %p25 = scmp.ne.s32.totalorder %s17, %s20
    %p26 = scmp.eq.s32.totalorder %s7, 0
    %p27 = por %p25, %p26
    %p28 = scmp.ne.s32.totalorder %s17, %s20
    %p29 = scmp.eq.s32.totalorder %s12, 1
    %p30 = por %p28, %p29
    %p31 = scmp.ne.s32.totalorder %s20, %s21
    %p32 = scmp.eq.s32.totalorder %s12, 0
    %p33 = por %p31, %p32
    %p34 = scmp.ne.s32.totalorder %s20, %s21
    %p35 = scmp.eq.s32.totalorder %s13, 1
    %p36 = por %p34, %p35
    %p38 = scmp.ne.s32.totalorder %s21, %s37
    %p39 = scmp.eq.s32.totalorder %s13, 0
    %p40 = por %p38, %p39
    %s41 = ssub.s32 %s7, %s14
    %p42 = scmp.eq.s32.totalorder %s41, 0
    %s44 = sadd.s32 %s43, 1
    %s45 = scalar_select %p42, %s43, %s44
    %p48 = pneg %p42
    %p49 = scmp.eq.s32.totalorder %s7, 1
    %p50 = por %p48, %p49
    %p51 = scmp.ne.s32.totalorder %s43, %s46
    %p52 = scmp.eq.s32.totalorder %s7, 0
    %p53 = por %p51, %p52
    %p54 = scmp.ne.s32.totalorder %s43, %s46
    %p55 = scmp.eq.s32.totalorder %s12, 1
    %p56 = por %p54, %p55
    %p57 = scmp.ne.s32.totalorder %s46, %s47
    %p58 = scmp.eq.s32.totalorder %s12, 0
    %p59 = por %p57, %p58
    %p60 = scmp.ne.s32.totalorder %s46, %s47
    %p61 = scmp.eq.s32.totalorder %s13, 1
    %p62 = por %p60, %p61
    %p64 = scmp.ne.s32.totalorder %s47, %s63
    %p65 = scmp.eq.s32.totalorder %s13, 0
    %p66 = por %p64, %p65
    %p67 = scmp.le.s32.totalorder 1, %s7
    %p68 = scmp.lt.s32.totalorder %s7, 3
    %p69 = pnand %p67, %p68
    %p70 = pneg %p69
    // Predicated region
    $region9: #{feature_extractor_forward.3} parent=5 // pred_check
      _
    $region10: #{feature_extractor_forward.3} parent=5 // pred_check_branch
      %72 = sbr.rel (%p69) target = $region12
    $region11: #{feature_extractor_forward.3} parent=5 // pred_region
      %s73 = ssub.s32 %s7, 1
    $region12: #{feature_extractor_forward.3} parent=5 // pred_fallthru
      _
    %p74 = scmp.lt.s32.totalorder %s7, 2
    // Predicated region
    $region13: #{feature_extractor_forward.3} parent=5 // pred_check
      %p75 = pneg %p74
    $region14: #{feature_extractor_forward.3} parent=5 // pred_check_branch
      %77 = sbr.rel (%p75) target = $region16
    $region15: #{feature_extractor_forward.3} parent=5 // pred_region
      // Predicated region
      $region17: #{feature_extractor_forward.3} parent=15 // pred_check
        %p78 = pneg %p27
      $region18: #{feature_extractor_forward.3} parent=15 // pred_check_branch
        %80 = sbr.rel (%p78) target = $region20
      $region19: #{feature_extractor_forward.3} parent=15 // pred_region
        %p81 = scmp.lt.s32.totalorder %s7, 1
        %s82 = scalar_select %p81, %s7, 1
        %s83 = smul.addr %s82, 16
        %s84 = smul.addr %s83, 4
        %s85 = scalar_lea.vmem %s0, %s84
      $region20: #{feature_extractor_forward.3} parent=15 // pred_fallthru
        _
    $region16: #{feature_extractor_forward.3} parent=5 // pred_fallthru
      _
    %p86 = scmp.le.s32.totalorder 1, %s7
    %p87 = scmp.lt.s32.totalorder %s7, 3
    %p88 = pnand %p86, %p87
    %p89 = pneg %p88
    // Predicated region
    $region21: #{feature_extractor_forward.3} parent=5 // pred_check
      _
    $region22: #{feature_extractor_forward.3} parent=5 // pred_check_branch
      %91 = sbr.rel (%p88) target = $region24
    $region23: #{feature_extractor_forward.3} parent=5 // pred_region
      %s92 = ssub.s32 %s7, 1
      %p93 = scmp.lt.s32.totalorder %s12, 1
      %s94 = scalar_select %p93, %s12, 1
      %s95 = smul.addr %s94, 16
      %s96 = smul.addr %s95, 4
      %s97 = scalar_lea.vmem %s0, %s96
      %p98 = pneg %p33
      %p99 = pneg %p30
      %p100 = pneg %p59
      %p101 = pneg %p56
      %p102 = scmp.lt.s32.totalorder %s12, 1
      %s103 = scalar_select %p102, %s12, 1
      %s104 = smul.addr %s103, 4
      %s105 = smul.addr %s104, 4
      %s106 = scalar_lea.vmem %s1, %s105
      %p107 = scmp.lt.s32.totalorder %s12, 1
      %s108 = scalar_select %p107, %s12, 1
      %s109 = smul.addr %s108, 16
      %s110 = smul.addr %s109, 4
      %s111 = scalar_lea.vmem %s0, %s110
      %p112 = scmp.lt.s32.totalorder %s12, 1
      %s113 = scalar_select %p112, %s12, 1
      %s114 = smul.addr %s113, 4
      %s115 = smul.addr %s114, 4
      %s116 = scalar_lea.vmem %s1, %s115
      %v117 = vld [vmem:[%s111] sm:$0xff]
      %v118 = vld [vmem:[%s111 + $0x8] sm:$0xff]
      %v119 = vld [vmem:[%s111 + $0x10] sm:$0xff]
      %v120 = vld [vmem:[%s111 + $0x18] sm:$0xff]
      %v121 = vld [vmem:[%s111 + $0x20] sm:$0xff]
      %v122 = vld [vmem:[%s111 + $0x28] sm:$0xff]
      %v123 = vld [vmem:[%s111 + $0x30] sm:$0xff]
      %v124 = vld [vmem:[%s111 + $0x38] sm:$0xff]
      %128 = vst [vmem:[#allocation1] ss:$2 sm:$0xff] %v118
      %v129 = vld.sshfl [vmem:[#allocation1] sm:$0xff pattern:$0x75316420]
      %v130 = vld.sshfl [vmem:[#allocation1 + $0x8] sm:$0xff pattern:$0x75316420]
      %s131 = scalar_lea.vmem [#allocation1], 16
      %132 = vst [vmem:[%s131] ss:$2 sm:$0xff] %v120
      %v133 = vld.sshfl [vmem:[#allocation1 + $0x10] sm:$0xff pattern:$0x75316420]
      %v134 = vld.sshfl [vmem:[#allocation1 + $0x18] sm:$0xff pattern:$0x75316420]
      %s135 = scalar_lea.vmem [#allocation1], 32
      %136 = vst [vmem:[%s135] ss:$2 sm:$0xff] %v122
      %v137 = vld.sshfl [vmem:[#allocation1 + $0x20] sm:$0xff pattern:$0x75316420]
      %v138 = vld.sshfl [vmem:[#allocation1 + $0x28] sm:$0xff pattern:$0x75316420]
      %v139 = vmax.f32 %v117, %v118
      %v140 = vmax.f32 %v119, %v120
      %v141 = vmax.f32 %v121, %v122
      %v142 = vmax.f32 %v123, %v124
      %v144 = vrot.slane 0.0, 4
      %v145 = vrot.slane %v130, 4
      %v146 = vrot.slane %v134, 4
      %v147 = vrot.slane %v138, 4
      %vm148 = vcmask 1043456
      %v149 = vsel %vm148, 0.0, %v144
      %v150 = vsel %vm148, %v129, %v145
      %v151 = vsel %vm148, %v133, %v146
      %v152 = vsel %vm148, %v137, %v147
      %v157 = vmax.f32 %v139, %v149
      %v158 = vmax.f32 %v140, %v150
      %v159 = vmax.f32 %v141, %v151
      %v160 = vmax.f32 %v142, %v152
      %165 = vst [vmem:[#allocation1] ss:$2 sm:$0xff] %v157
      %v166 = vld.sshfl [vmem:[#allocation1 + $0x8] sm:$0xff pattern:$0x75316420]
      %s167 = scalar_lea.vmem [#allocation1], 16
      %168 = vst [vmem:[%s167] ss:$2 sm:$0xff] %v158
      %v169 = vld.sshfl [vmem:[#allocation1 + $0x18] sm:$0xff pattern:$0x75316420]
      %s170 = scalar_lea.vmem [#allocation1], 32
      %171 = vst [vmem:[%s170] ss:$2 sm:$0xff] %v159
      %v172 = vld.sshfl [vmem:[#allocation1 + $0x28] sm:$0xff pattern:$0x75316420]
      %s173 = scalar_lea.vmem [#allocation1], 48
      %174 = vst [vmem:[%s173] ss:$2 sm:$0xff] %v160
      %v175 = vld.sshfl [vmem:[#allocation1 + $0x38] sm:$0xff pattern:$0x75316420]
      %v176 = vrot.slane %v166, 7
      %v177 = vrot.slane %v169, 7
      %v178 = vrot.slane %v172, 7
      %v179 = vrot.slane %v175, 7
      %vm184 = vcmask 1040384
      %v185 = vsel %vm184, 0.0, %v176
      %v186 = vsel %vm184, 0.0, %v177
      %v187 = vsel %vm184, 0.0, %v178
      %v188 = vsel %vm184, 0.0, %v179
      %v189 = vrot.slane %v157, 4
      %v190 = vrot.slane %v158, 4
      %v191 = vrot.slane %v159, 4
      %v192 = vrot.slane %v160, 4
      %v197 = vmax.f32 %v157, %v189
      %v198 = vmax.f32 %v158, %v190
      %v199 = vmax.f32 %v159, %v191
      %v200 = vmax.f32 %v160, %v192
      %v201 = vmax.f32 %v197, %v185
      %v202 = vmax.f32 %v198, %v186
      %v203 = vmax.f32 %v199, %v187
      %v204 = vmax.f32 %v200, %v188
      %205 = vst [vmem:[%s116] sm:$0xf] %v201
      %206 = vst [vmem:[%s116 + $0x4] sm:$0xf] %v202
      %207 = vst [vmem:[%s116 + $0x8] sm:$0xf] %v203
      %208 = vst [vmem:[%s116 + $0xc] sm:$0xf] %v204
      %p209 = scmp.lt.s32.totalorder %s12, 1
      %s210 = scalar_select %p209, %s12, 1
      %s211 = smul.addr %s210, 4
      %s212 = smul.addr %s211, 4
      %s213 = scalar_lea.vmem %s1, %s212
      // Predicated region
      $region25: #{feature_extractor_forward.3} parent=23 // pred_check
        %p214 = pneg %p56
      $region26: #{feature_extractor_forward.3} parent=23 // pred_check_branch
        %216 = sbr.rel (%p214) target = $region28
      $region27: #{feature_extractor_forward.3} parent=23 // pred_region
        _
      $region28: #{feature_extractor_forward.3} parent=23 // pred_fallthru
        _
    $region24: #{feature_extractor_forward.3} parent=5 // pred_fallthru
      _
    %p217 = scmp.le.s32.totalorder 2, %s7
    // Predicated region
    $region29: #{feature_extractor_forward.3} parent=5 // pred_check
      %p218 = pneg %p217
    $region30: #{feature_extractor_forward.3} parent=5 // pred_check_branch
      %220 = sbr.rel (%p218) target = $region32
    $region31: #{feature_extractor_forward.3} parent=5 // pred_region
      %s221 = ssub.s32 %s7, 2
      // Predicated region
      $region33: #{feature_extractor_forward.3} parent=31 // pred_check
        %p222 = pneg %p62
      $region34: #{feature_extractor_forward.3} parent=31 // pred_check_branch
        %224 = sbr.rel (%p222) target = $region36
      $region35: #{feature_extractor_forward.3} parent=31 // pred_region
        %p225 = scmp.lt.s32.totalorder %s13, 1
        %s226 = scalar_select %p225, %s13, 1
        %s227 = smul.addr %s226, 4
        %s228 = smul.addr %s227, 4
        %s229 = scalar_lea.vmem %s1, %s228
      $region36: #{feature_extractor_forward.3} parent=31 // pred_fallthru
        _
    $region32: #{feature_extractor_forward.3} parent=5 // pred_fallthru
      _
  $region6: #{feature_extractor_forward.3} parent=0 // loop_footer
    %s11 = sadd.s32 1, %s7
  $region7: #{feature_extractor_forward.3} parent=0 // loop_footer_branch
    %6 = sbr.rel target = $region3
  $region8: #{feature_extractor_forward.3} parent=0 // loop_exit
    _

// kernel: feature_extractor_forward.2
$region0: #{feature_extractor_forward.2}
  #allocation0 [shape = 'u32[]', space=smem, size = 0x4, offset = 0x4, fixed_abs, tag = 'smem constant byte address 0x4 - core index']
  #allocation1 [shape = 'u32[72,128]{1,0:T(1,128)}', space=vmem, size = 0x9000, scoped, tag = 'internal scratch']
  %s0 = inlined_call_operand.vmem [shape: bf16[128,147], index: 0, kind: input, shape index: {}]
  %s1 = inlined_call_operand.vmem [shape: bf16[147,128], index: 1, kind: input, shape index: {}]
  %s2 = inlined_call_operand.vmem [shape: f32[1,128], index: 2, kind: input, shape index: {}]
  %s3 = inlined_call_operand.vmem [shape: f32[128,128], index: 3, kind: output, shape index: {}]
  %s4 = sld [smem:[#allocation0]]
  $region22: #{feature_extractor_forward.2} parent=0
    _
  %s6 = ssub.s32 1, %s4
  %s7 = scalar_select 0, %s6, %s4
  // Predicated region
  $region2: #{feature_extractor_forward.2} parent=0 // pred_check
    _
  $region3: #{feature_extractor_forward.2} parent=0 // pred_check_branch
    %9 = sbr.rel (0) target = $region5
  $region4: #{feature_extractor_forward.2} parent=0 // pred_region
    _
  $region5: #{feature_extractor_forward.2} parent=0 // pred_fallthru
    _
  // Predicated region
  $region6: #{feature_extractor_forward.2} parent=0 // pred_check
    _
  $region7: #{feature_extractor_forward.2} parent=0 // pred_check_branch
    %11 = sbr.rel (0) target = $region9
  $region8: #{feature_extractor_forward.2} parent=0 // pred_region
    _
  $region9: #{feature_extractor_forward.2} parent=0 // pred_fallthru
    _
  // Predicated region
  $region10: #{feature_extractor_forward.2} parent=0 // pred_check
    _
  $region11: #{feature_extractor_forward.2} parent=0 // pred_check_branch
    %13 = sbr.rel (0) target = $region13
  $region12: #{feature_extractor_forward.2} parent=0 // pred_region
    _
  $region13: #{feature_extractor_forward.2} parent=0 // pred_fallthru
    _
  %v15 = vld [vmem:[%s0] sm:$0xff]
  %v16 = vld [vmem:[%s0 + $0x8] sm:$0xff]
  %v17 = vld [vmem:[%s0 + $0x10] sm:$0xff]
  %v18 = vld [vmem:[%s0 + $0x18] sm:$0xff]
  %v19 = vld [vmem:[%s0 + $0x20] sm:$0xff]
  %v20 = vld [vmem:[%s0 + $0x28] sm:$0xff]
  %v21 = vld [vmem:[%s0 + $0x30] sm:$0xff]
  %v22 = vld [vmem:[%s0 + $0x38] sm:$0xff]
  %v23 = vld [vmem:[%s0 + $0x40] sm:$0xff]
  %v24 = vld [vmem:[%s0 + $0x48] sm:$0xff]
  %v25 = vld [vmem:[%s0 + $0x50] sm:$0xff]
  %v26 = vld [vmem:[%s0 + $0x58] sm:$0xff]
  %v27 = vld [vmem:[%s0 + $0x60] sm:$0xff]
  %v28 = vld [vmem:[%s0 + $0x68] sm:$0xff]
  %v29 = vld [vmem:[%s0 + $0x70] sm:$0xff]
  %v30 = vld [vmem:[%s0 + $0x78] sm:$0xff]
  %v31 = vld [vmem:[%s1] sm:$0xf]
  %v32 = vld [vmem:[%s1 + $0x4] sm:$0xf]
  %v33 = vld [vmem:[%s1 + $0x8] sm:$0xf]
  %v34 = vld [vmem:[%s1 + $0xc] sm:$0xf]
  %v35 = vld [vmem:[%s1 + $0x10] sm:$0xf]
  %v36 = vld [vmem:[%s1 + $0x14] sm:$0xf]
  %v37 = vld [vmem:[%s1 + $0x18] sm:$0xf]
  %v38 = vld [vmem:[%s1 + $0x1c] sm:$0xf]
  %v39 = vld [vmem:[%s1 + $0x20] sm:$0xf]
  %v40 = vld [vmem:[%s1 + $0x24] sm:$0xf]
  %v41 = vld [vmem:[%s1 + $0x28] sm:$0xf]
  %v42 = vld [vmem:[%s1 + $0x2c] sm:$0xf]
  %v43 = vld [vmem:[%s1 + $0x30] sm:$0xf]
  %v44 = vld [vmem:[%s1 + $0x34] sm:$0xf]
  %v45 = vld [vmem:[%s1 + $0x38] sm:$0xf]
  %v46 = vld [vmem:[%s1 + $0x3c] sm:$0xf]
  %v47 = vld [vmem:[%s1 + $0x40] sm:$0xf]
  %v48 = vld [vmem:[%s1 + $0x44] sm:$0xf]
  %v49 = vld [vmem:[%s1 + $0x48] sm:$0x3]
  %v50 = vld [vmem:[%s2] sm:$0x1]
  %v52 = vperm.slane %v50, 0
  %v70 = vunpack.c.l.b16 %v15
  %v71 = vunpack.c.h.b16 %v15
  %v72 = vunpack.c.l.b16 %v16
  %v73 = vunpack.c.h.b16 %v16
  %v74 = vunpack.c.l.b16 %v17
  %v75 = vunpack.c.h.b16 %v17
  %v76 = vunpack.c.l.b16 %v18
  %v77 = vunpack.c.h.b16 %v18
  %v78 = vunpack.c.l.b16 %v19
  %v79 = vunpack.c.h.b16 %v19
  %v80 = vunpack.c.l.b16 %v20
  %v81 = vunpack.c.h.b16 %v20
  %v82 = vunpack.c.l.b16 %v21
  %v83 = vunpack.c.h.b16 %v21
  %v84 = vunpack.c.l.b16 %v22
  %v85 = vunpack.c.h.b16 %v22
  %v86 = vunpack.c.l.b16 %v23
  %v87 = vunpack.c.h.b16 %v23
  %v88 = vunpack.c.l.b16 %v24
  %v89 = vunpack.c.h.b16 %v24
  %v90 = vunpack.c.l.b16 %v25
  %v91 = vunpack.c.h.b16 %v25
  %v92 = vunpack.c.l.b16 %v26
  %v93 = vunpack.c.h.b16 %v26
  %v94 = vunpack.c.l.b16 %v27
  %v95 = vunpack.c.h.b16 %v27
  %v96 = vunpack.c.l.b16 %v28
  %v97 = vunpack.c.h.b16 %v28
  %v98 = vunpack.c.l.b16 %v29
  %v99 = vunpack.c.h.b16 %v29
  %v100 = vunpack.c.l.b16 %v30
  %v101 = vunpack.c.h.b16 %v30
  %v102 = vpack.c.b16 %v72, %v70
  %v103 = vpack.c.b16 %v73, %v71
  %v104 = vpack.c.b16 %v76, %v74
  %v105 = vpack.c.b16 %v77, %v75
  %v106 = vpack.c.b16 %v80, %v78
  %v107 = vpack.c.b16 %v81, %v79
  %v108 = vpack.c.b16 %v84, %v82
  %v109 = vpack.c.b16 %v85, %v83
  %v110 = vpack.c.b16 %v88, %v86
  %v111 = vpack.c.b16 %v89, %v87
  %v112 = vpack.c.b16 %v92, %v90
  %v113 = vpack.c.b16 %v93, %v91
  %v114 = vpack.c.b16 %v96, %v94
  %v115 = vpack.c.b16 %v97, %v95
  %v116 = vpack.c.b16 %v100, %v98
  %v117 = vpack.c.b16 %v101, %v99
  %v145 = vunpack.c.l.b16 %v31
  %v146 = vunpack.c.l.b16 %v32
  %v147 = vunpack.c.l.b16 %v33
  %v148 = vunpack.c.l.b16 %v34
  %v149 = vunpack.c.l.b16 %v35
  %v150 = vunpack.c.l.b16 %v36
  %v151 = vunpack.c.l.b16 %v37
  %v152 = vunpack.c.l.b16 %v38
  %v153 = vunpack.c.l.b16 %v39
  %v154 = vunpack.c.l.b16 %v40
  %v155 = vunpack.c.l.b16 %v41
  %v156 = vunpack.c.l.b16 %v42
  %v157 = vunpack.c.l.b16 %v43
  %v158 = vunpack.c.l.b16 %v44
  %v159 = vunpack.c.l.b16 %v45
  %v160 = vunpack.c.l.b16 %v46
  %v161 = vunpack.c.l.b16 %v47
  %v162 = vunpack.c.l.b16 %v48
  %v163 = vunpack.c.l.b16 %v49
  %v164 = vpack.c.b16 %v146, %v145
  %v165 = vpack.c.b16 %v148, %v147
  %v166 = vpack.c.b16 %v150, %v149
  %v167 = vpack.c.b16 %v152, %v151
  %v168 = vpack.c.b16 %v154, %v153
  %v169 = vpack.c.b16 %v156, %v155
  %v170 = vpack.c.b16 %v158, %v157
  %v171 = vpack.c.b16 %v160, %v159
  %v172 = vpack.c.b16 %v162, %v161
  %v173 = vpack.c.b16 %v163, %v163
  %vm183 = vcmask 154624
  %v185 = vsel %vm183, %v103, 0
  %v188 = vsel %vm183, %v105, 0
  %v191 = vsel %vm183, %v107, 0
  %v194 = vsel %vm183, %v109, 0
  %v197 = vsel %vm183, %v111, 0
  %v200 = vsel %vm183, %v113, 0
  %v203 = vsel %vm183, %v115, 0
  %v206 = vsel %vm183, %v117, 0
  %vm208 = vcmask 1040384
  %vm209 = vcmask 1041408
  %v210 = vsel %vm208, 4294967295, 65535
  %v211 = vsel %vm209, %v210, 0
  %v213 = vand.u32 %v173, %v211
  %215 = vmatpush.bf16.msra.mxu0 %v171
  %216 = vmatpush.bf16.msra.mxu0 %v170
  %217 = vmatpush.bf16.msra.mxu0 %v169
  %218 = vmatpush.bf16.msra.mxu0 %v168
  %219 = vmatpush.bf16.msra.mxu0 %v167
  %220 = vmatpush.bf16.msra.mxu0 %v166
  %221 = vmatpush.bf16.msra.mxu0 %v165
  %222 = vmatpush.bf16.msra.mxu0 %v164
  %223 = vmatmul.bf16.gmra.mxu0 %v102
  %v224 = vpop.f32.mrf.mxu0
  %v225 = vadd.f32 %v52, %v224
  %v226 = vpop.f32.mrf.mxu0
  %v227 = vadd.f32 %v52, %v226
  %228 = vmatmul.bf16.gmra.mxu0 %v104
  %v229 = vpop.f32.mrf.mxu0
  %v230 = vadd.f32 %v52, %v229
  %v231 = vpop.f32.mrf.mxu0
  %v232 = vadd.f32 %v52, %v231
  %233 = vmatmul.bf16.gmra.mxu0 %v106
  %v234 = vpop.f32.mrf.mxu0
  %v235 = vadd.f32 %v52, %v234
  %v236 = vpop.f32.mrf.mxu0
  %v237 = vadd.f32 %v52, %v236
  %238 = vmatmul.bf16.gmra.mxu0 %v108
  %v239 = vpop.f32.mrf.mxu0
  %v240 = vadd.f32 %v52, %v239
  %v241 = vpop.f32.mrf.mxu0
  %v242 = vadd.f32 %v52, %v241
  %243 = vmatmul.bf16.gmra.mxu0 %v110
  %v244 = vpop.f32.mrf.mxu0
  %v245 = vadd.f32 %v52, %v244
  %v246 = vpop.f32.mrf.mxu0
  %v247 = vadd.f32 %v52, %v246
  %248 = vmatmul.bf16.gmra.mxu0 %v112
  %v249 = vpop.f32.mrf.mxu0
  %v250 = vadd.f32 %v52, %v249
  %v251 = vpop.f32.mrf.mxu0
  %v252 = vadd.f32 %v52, %v251
  %253 = vmatmul.bf16.gmra.mxu0 %v114
  %v254 = vpop.f32.mrf.mxu0
  %v255 = vadd.f32 %v52, %v254
  %v256 = vpop.f32.mrf.mxu0
  %v257 = vadd.f32 %v52, %v256
  %258 = vmatmul.bf16.gmra.mxu0 %v116
  %v259 = vpop.f32.mrf.mxu0
  %v260 = vadd.f32 %v52, %v259
  %v261 = vpop.f32.mrf.mxu0
  %v262 = vadd.f32 %v52, %v261
  %263 = vdwg.mxu0
  %264 = vmatpush.bf16.msra.mxu0 0
  %265 = vmatpush.bf16.msra.mxu0 0
  %266 = vmatpush.bf16.msra.mxu0 0
  %267 = vmatpush.bf16.msra.mxu0 0
  %268 = vmatpush.bf16.msra.mxu0 0
  %269 = vmatpush.bf16.msra.mxu0 0
  %270 = vmatpush.bf16.msra.mxu0 %v213
  %271 = vmatpush.bf16.msra.mxu0 %v172
  %272 = vmatmul.bf16.gmra.mxu0 %v185
  %v273 = vpop.f32.mrf.mxu0
  %v274 = vadd.f32 %v225, %v273
  %v275 = vpop.f32.mrf.mxu0
  %v276 = vadd.f32 %v227, %v275
  %277 = vmatmul.bf16.gmra.mxu0 %v188
  %v278 = vpop.f32.mrf.mxu0
  %v279 = vadd.f32 %v230, %v278
  %v280 = vpop.f32.mrf.mxu0
  %v281 = vadd.f32 %v232, %v280
  %282 = vmatmul.bf16.gmra.mxu0 %v191
  %v283 = vpop.f32.mrf.mxu0
  %v284 = vadd.f32 %v235, %v283
  %v285 = vpop.f32.mrf.mxu0
  %v286 = vadd.f32 %v237, %v285
  %287 = vmatmul.bf16.gmra.mxu0 %v194
  %v288 = vpop.f32.mrf.mxu0
  %v289 = vadd.f32 %v240, %v288
  %v290 = vpop.f32.mrf.mxu0
  %v291 = vadd.f32 %v242, %v290
  %292 = vmatmul.bf16.gmra.mxu0 %v197
  %v293 = vpop.f32.mrf.mxu0
  %v294 = vadd.f32 %v245, %v293
  %v295 = vpop.f32.mrf.mxu0
  %v296 = vadd.f32 %v247, %v295
  %297 = vmatmul.bf16.gmra.mxu0 %v200
  %v298 = vpop.f32.mrf.mxu0
  %v299 = vadd.f32 %v250, %v298
  %v300 = vpop.f32.mrf.mxu0
  %v301 = vadd.f32 %v252, %v300
  %302 = vmatmul.bf16.gmra.mxu0 %v203
  %v303 = vpop.f32.mrf.mxu0
  %v304 = vadd.f32 %v255, %v303
  %v305 = vpop.f32.mrf.mxu0
  %v306 = vadd.f32 %v257, %v305
  %307 = vmatmul.bf16.gmra.mxu0 %v206
  %v308 = vpop.f32.mrf.mxu0
  %v309 = vadd.f32 %v260, %v308
  %v310 = vpop.f32.mrf.mxu0
  %v311 = vadd.f32 %v262, %v310
  %312 = vdwg.mxu0
  %v313 = vmax.f32 %v274, 0.0
  %v314 = vmax.f32 %v276, 0.0
  %v315 = vmax.f32 %v279, 0.0
  %v316 = vmax.f32 %v281, 0.0
  %v317 = vmax.f32 %v284, 0.0
  %v318 = vmax.f32 %v286, 0.0
  %v319 = vmax.f32 %v289, 0.0
  %v320 = vmax.f32 %v291, 0.0
  %v321 = vmax.f32 %v294, 0.0
  %v322 = vmax.f32 %v296, 0.0
  %v323 = vmax.f32 %v299, 0.0
  %v324 = vmax.f32 %v301, 0.0
  %v325 = vmax.f32 %v304, 0.0
  %v326 = vmax.f32 %v306, 0.0
  %v327 = vmax.f32 %v309, 0.0
  %v328 = vmax.f32 %v311, 0.0
  %329 = vst [vmem:[%s3] sm:$0xff] %v313
  %330 = vst [vmem:[%s3 + $0x8] sm:$0xff] %v314
  %331 = vst [vmem:[%s3 + $0x10] sm:$0xff] %v315
  %332 = vst [vmem:[%s3 + $0x18] sm:$0xff] %v316
  %333 = vst [vmem:[%s3 + $0x20] sm:$0xff] %v317
  %334 = vst [vmem:[%s3 + $0x28] sm:$0xff] %v318
  %335 = vst [vmem:[%s3 + $0x30] sm:$0xff] %v319
  %336 = vst [vmem:[%s3 + $0x38] sm:$0xff] %v320
  %337 = vst [vmem:[%s3 + $0x40] sm:$0xff] %v321
  %338 = vst [vmem:[%s3 + $0x48] sm:$0xff] %v322
  %339 = vst [vmem:[%s3 + $0x50] sm:$0xff] %v323
  %340 = vst [vmem:[%s3 + $0x58] sm:$0xff] %v324
  %341 = vst [vmem:[%s3 + $0x60] sm:$0xff] %v325
  %342 = vst [vmem:[%s3 + $0x68] sm:$0xff] %v326
  %343 = vst [vmem:[%s3 + $0x70] sm:$0xff] %v327
  %344 = vst [vmem:[%s3 + $0x78] sm:$0xff] %v328
  // Predicated region
  $region14: #{feature_extractor_forward.2} parent=0 // pred_check
    _
  $region15: #{feature_extractor_forward.2} parent=0 // pred_check_branch
    %346 = sbr.rel (0) target = $region17
  $region16: #{feature_extractor_forward.2} parent=0 // pred_region
    _
  $region17: #{feature_extractor_forward.2} parent=0 // pred_fallthru
    _
  // Predicated region
  $region18: #{feature_extractor_forward.2} parent=0 // pred_check
    _
  $region19: #{feature_extractor_forward.2} parent=0 // pred_check_branch
    %348 = sbr.rel (0) target = $region21
  $region20: #{feature_extractor_forward.2} parent=0 // pred_region
    _
  $region21: #{feature_extractor_forward.2} parent=0 // pred_fallthru
    _

</llo_original>
